<compile_context>
chip_gen: v7x
topology: tpu7x:2x2x1
jax: 0.10.0
libtpu: 0.0.40
codegen_flags: <defaults>
</compile_context>

<pallas_src>
import jax
import jax.numpy as jnp
from jax.experimental import pallas as pl
from jax.experimental.pallas import tpu as pltpu


def channel_attn_kernel(x_ref, w1_ref, w2_ref, o_ref):
    # x_ref block: (1, C, HW) -- C on sublanes, HW (lane-dense) on lanes.
    x = x_ref[0]                      # (C, HW), native input dtype
    C, HW = x.shape

    # Spatial pooling: lane reductions on the XLU.  Sum accumulates in f32 so a
    # bf16 input does not lose precision in the mean; max stays in native dtype.
    x_sum = jnp.sum(x, axis=1, keepdims=True, dtype=jnp.float32)   # (C, 1) f32
    x_avg = x_sum * (1.0 / HW)                                     # (C, 1) f32
    x_max = jnp.max(x, axis=1, keepdims=True)                      # (C, 1) native

    w1 = w1_ref[...]                  # (Cr, C)  fc1 weight, native dtype
    w2 = w2_ref[...]                  # (C, Cr)  fc2 weight, native dtype

    # Stack avg/max as the M=2 columns of one (C, 2) operand so the shared MLP
    # runs once.  Built with iota+where (broadcast + select) instead of a
    # minor-dim concatenate for robust lowering.
    col = jax.lax.broadcasted_iota(jnp.int32, (C, 2), 1)           # lane index 0/1
    pooled = jnp.where(col == 0, x_avg, x_max.astype(x_avg.dtype)) # (C, 2) f32
    pooled = pooled.astype(w1.dtype)                               # MXU-native dtype

    # fc1: (Cr, C) @ (C, 2) -> (Cr, 2); ReLU; fc2: (C, Cr) @ (Cr, 2) -> (C, 2).
    h = jnp.dot(w1, pooled, preferred_element_type=jnp.float32)
    h = jnp.maximum(h, 0.0)
    a = jnp.dot(w2, h.astype(w2.dtype), preferred_element_type=jnp.float32)

    # attn = sigmoid(fc2(act(fc1(avg))) + fc2(act(fc1(max))))  -> (C, 1) f32
    attn = jax.nn.sigmoid(jnp.sum(a, axis=1, keepdims=True))

    # Broadcast multiply in the input dtype (lane broadcast of the (C,1) column);
    # only attn is cast down.
    o_ref[0] = (x * attn.astype(x.dtype)).astype(o_ref.dtype)


def channel_attn(x_nchw, w1, w2):
    """x_nchw: (B, C, H, W); w1: (Cr, C) fc1 weight; w2: (C, Cr) fc2 weight."""
    B, C, H, W = x_nchw.shape
    Cr = w1.shape[0]
    HW = H * W

    # Free reshape, no transpose / HBM round-trip: (B, C, H, W) -> (B, C, HW).
    x = x_nchw.reshape(B, C, HW)

    itemsize = jnp.dtype(x_nchw.dtype).itemsize
    x_block_bytes = C * HW * itemsize
    w_bytes = (w1.size * jnp.dtype(w1.dtype).itemsize
               + w2.size * jnp.dtype(w2.dtype).itemsize)
    # Double-buffered input block + double-buffered output block + weights + headroom.
    vmem_limit = 4 * x_block_bytes + 2 * w_bytes + (4 << 20)
    vmem_limit = int(min(max(vmem_limit, 8 << 20), 96 << 20))

    out = pl.pallas_call(
        channel_attn_kernel,
        out_shape=jax.ShapeDtypeStruct((B, C, HW), x_nchw.dtype),
        grid_spec=pltpu.PrefetchScalarGridSpec(
            num_scalar_prefetch=0,
            grid=(B,),
            in_specs=[
                pl.BlockSpec((1, C, HW), lambda b: (b, 0, 0)),
                pl.BlockSpec((Cr, C), lambda b: (0, 0)),
                pl.BlockSpec((C, Cr), lambda b: (0, 0)),
            ],
            out_specs=pl.BlockSpec((1, C, HW), lambda b: (b, 0, 0)),
        ),
        compiler_params=pltpu.CompilerParams(
            dimension_semantics=("parallel",),
            vmem_limit_bytes=vmem_limit),
    )(x, w1, w2)

    return out.reshape(B, C, H, W)


def channel_attn_ref(x, w1, w2):
    # Pure-JAX reference matching PyTorch semantics (NCHW).
    x_avg = jnp.mean(x, axis=(2, 3), keepdims=True)        # (B,C,1,1)
    x_max = jnp.max(x, axis=(2, 3), keepdims=True)          # (B,C,1,1)

    def mlp(v):  # v (B,C,1,1)
        v = v[:, :, 0, 0]                                    # (B,C)
        h = jnp.maximum(v @ w1.T, 0.0)                       # (B,Cr)
        return (h @ w2.T)[:, :, None, None]                  # (B,C,1,1)

    attn = mlp(x_avg) + mlp(x_max)
    return x * jax.nn.sigmoid(attn)


if __name__ == "__main__":
    key = jax.random.PRNGKey(0)
    B, C, H, W = 2, 32, 16, 16
    reduction = 16
    Cr = C // reduction

    kx, k1, k2 = jax.random.split(key, 3)
    x = jax.random.normal(kx, (B, C, H, W), dtype=jnp.float32)
    # fc1: Conv2d(C, Cr, 1, bias=False) -> weight (Cr, C, 1, 1) -> (Cr, C)
    w1 = jax.random.normal(k1, (Cr, C), dtype=jnp.float32) * 0.1
    # fc2: Conv2d(Cr, C, 1, bias=False) -> weight (C, Cr, 1, 1) -> (C, Cr)
    w2 = jax.random.normal(k2, (C, Cr), dtype=jnp.float32) * 0.1

    out = jax.block_until_ready(channel_attn(x, w1, w2))

    ref = channel_attn_ref(x, w1, w2)
    assert out.shape == (B, C, H, W)
    assert jnp.allclose(out, ref, atol=1e-5, rtol=1e-5), "mismatch vs reference"

    print("KERNEL_OK")
</pallas_src>

<mosaic_0001>
module attributes {stable_mosaic.version = 11 : i64} {
  func.func @channel_attn_kernel(%arg0: i32, %arg1: memref<1x32x256xf32, #tpu.memory_space<vmem>>, %arg2: memref<2x32xf32, #tpu.memory_space<vmem>>, %arg3: memref<32x2xf32, #tpu.memory_space<vmem>>, %arg4: memref<1x32x256xf32, #tpu.memory_space<vmem>>) attributes {dimension_semantics = [#tpu.dimension_semantics<parallel>], iteration_bounds = array<i64: 2>, scalar_prefetch = 0 : i64, scratch_operands = 0 : i64, tpu.core_type = #tpu.core_type<tc>, window_params = [{transform_indices = @transform_0, window_bounds = array<i64: 1, 32, 256>}, {pipeline_mode = #tpu.pipeline_mode<synchronous>, transform_indices = @transform_1, window_bounds = array<i64: 2, 32>}, {pipeline_mode = #tpu.pipeline_mode<synchronous>, transform_indices = @transform_2, window_bounds = array<i64: 32, 2>}, {transform_indices = @transform_3, window_bounds = array<i64: 1, 32, 256>}]} {
    %c0 = arith.constant 0 : index
    %c0_0 = arith.constant 0 : index
    %c0_1 = arith.constant 0 : index
    %0 = vector.load %arg1[%c0, %c0_0, %c0_1] : memref<1x32x256xf32, #tpu.memory_space<vmem>>, vector<1x32x256xf32>
    %1 = vector.shape_cast %0 : vector<1x32x256xf32> to vector<32x256xf32>
    %cst = arith.constant dense<0.000000e+00> : vector<32xf32>
    %2 = vector.multi_reduction <add>, %1, %cst [1] : vector<32x256xf32> to vector<32xf32>
    %3 = vector.shape_cast %2 : vector<32xf32> to vector<32x1xf32>
    %cst_2 = arith.constant 3.906250e-03 : f32
    %4 = vector.broadcast %cst_2 : f32 to vector<32x1xf32>
    %5 = arith.mulf %3, %4 : vector<32x1xf32>
    %cst_3 = arith.constant dense<0xFF800000> : vector<32xf32>
    %6 = vector.multi_reduction <maximumf>, %1, %cst_3 [1] : vector<32x256xf32> to vector<32xf32>
    %7 = vector.shape_cast %6 : vector<32xf32> to vector<32x1xf32>
    %c0_4 = arith.constant 0 : index
    %c0_5 = arith.constant 0 : index
    %8 = vector.load %arg2[%c0_4, %c0_5] : memref<2x32xf32, #tpu.memory_space<vmem>>, vector<2x32xf32>
    %c0_6 = arith.constant 0 : index
    %c0_7 = arith.constant 0 : index
    %9 = vector.load %arg3[%c0_6, %c0_7] : memref<32x2xf32, #tpu.memory_space<vmem>>, vector<32x2xf32>
    %10 = tpu.iota {dimensions = array<i32: 1>} : vector<32x2xi32>
    %c0_i32 = arith.constant 0 : i32
    %11 = vector.broadcast %c0_i32 : i32 to vector<32x2xi32>
    %12 = arith.cmpi eq, %10, %11 : vector<32x2xi32>
    %13 = vector.shape_cast %5 : vector<32x1xf32> to vector<32x1xf32>
    %14 = vector.broadcast %13 : vector<32x1xf32> to vector<32x2xf32>
    %15 = vector.shape_cast %7 : vector<32x1xf32> to vector<32x1xf32>
    %16 = vector.broadcast %15 : vector<32x1xf32> to vector<32x2xf32>
    %17 = arith.select %12, %14, %16 : vector<32x2xi1>, vector<32x2xf32>
    %cst_8 = arith.constant dense<0.000000e+00> : vector<2x2xf32>
    %18 = tpu.matmul %8, %17, %cst_8 {dimension_numbers = #tpu.dot_dimension_numbers<[1], [0], [0], [1], [0, 0, 1, 1], [], []>} : vector<2x32xf32>, vector<32x2xf32>, vector<2x2xf32> -> vector<2x2xf32>
    %cst_9 = arith.constant 0.000000e+00 : f32
    %19 = vector.broadcast %cst_9 : f32 to vector<2x2xf32>
    %20 = arith.maximumf %18, %19 : vector<2x2xf32>
    %cst_10 = arith.constant dense<0.000000e+00> : vector<32x2xf32>
    %21 = tpu.matmul %9, %20, %cst_10 {dimension_numbers = #tpu.dot_dimension_numbers<[1], [0], [0], [1], [0, 0, 1, 1], [], []>} : vector<32x2xf32>, vector<2x2xf32>, vector<32x2xf32> -> vector<32x2xf32>
    %cst_11 = arith.constant dense<0.000000e+00> : vector<32xf32>
    %22 = vector.multi_reduction <add>, %21, %cst_11 [1] : vector<32x2xf32> to vector<32xf32>
    %23 = vector.shape_cast %22 : vector<32xf32> to vector<32x1xf32>
    %24 = arith.negf %23 : vector<32x1xf32>
    %25 = math.exp %24 : vector<32x1xf32>
    %cst_12 = arith.constant 1.000000e+00 : f32
    %26 = vector.broadcast %cst_12 : f32 to vector<32x1xf32>
    %27 = arith.addf %26, %25 : vector<32x1xf32>
    %28 = arith.divf %26, %27 : vector<32x1xf32>
    %29 = vector.broadcast %28 : vector<32x1xf32> to vector<32x256xf32>
    %30 = arith.mulf %1, %29 : vector<32x256xf32>
    %c0_13 = arith.constant 0 : index
    %c0_14 = arith.constant 0 : index
    %c0_15 = arith.constant 0 : index
    %31 = vector.load %arg4[%c0_13, %c0_14, %c0_15] : memref<1x32x256xf32, #tpu.memory_space<vmem>>, vector<1x32x256xf32>
    %32 = vector.shape_cast %31 : vector<1x32x256xf32> to vector<32x256xf32>
    %33 = vector.shape_cast %30 : vector<32x256xf32> to vector<1x32x256xf32>
    tpu.vector_store %arg4[%c0_13, %c0_14, %c0_15], %33 {strides = array<i32>} : memref<1x32x256xf32, #tpu.memory_space<vmem>>, vector<1x32x256xf32>,
    return
  }
  func.func @transform_0(%arg0: i32) -> (i32, i32, i32) {
    %c0_i32 = arith.constant 0 : i32
    %c0_i32_0 = arith.constant 0 : i32
    %c0_i32_1 = arith.constant 0 : i32
    return %arg0, %c0_i32, %c0_i32_0 : i32, i32, i32
  }
  func.func @transform_1(%arg0: i32) -> (i32, i32) {
    %c0_i32 = arith.constant 0 : i32
    %c0_i32_0 = arith.constant 0 : i32
    %c0_i32_1 = arith.constant 0 : i32
    return %c0_i32, %c0_i32_0 : i32, i32
  }
  func.func @transform_2(%arg0: i32) -> (i32, i32) {
    %c0_i32 = arith.constant 0 : i32
    %c0_i32_0 = arith.constant 0 : i32
    %c0_i32_1 = arith.constant 0 : i32
    return %c0_i32, %c0_i32_0 : i32, i32
  }
  func.func @transform_3(%arg0: i32) -> (i32, i32, i32) {
    %c0_i32 = arith.constant 0 : i32
    %c0_i32_0 = arith.constant 0 : i32
    %c0_i32_1 = arith.constant 0 : i32
    return %arg0, %c0_i32, %c0_i32_0 : i32, i32, i32
  }
}

</mosaic_0001>

<llo_original>
// kernel: tpu_custom_call.1
$region0: #{tpu_custom_call.1}
  #allocation0 [shape = 'u32[]', space=smem, size = 0x4, offset = 0x4, fixed_abs, tag = 'smem constant byte address 0x4 - core index']
  #allocation1 [shape = 'u32[144,128]{1,0:T(1,128)}', space=vmem, size = 0x12000, scoped, tag = 'internal scratch']
  %s0 = inlined_call_operand.hbm [shape: f32[2,32,256], index: 0, kind: input, shape index: {}]
  %s1 = inlined_call_operand.vmem [shape: f32[2,32], index: 1, kind: input, shape index: {}]
  %s2 = inlined_call_operand.vmem [shape: f32[32,2], index: 2, kind: input, shape index: {}]
  %s3 = inlined_call_operand.hbm [shape: f32[2,32,256], index: 3, kind: output, shape index: {}]
  %s4 = sld [smem:[#allocation0]]
  $region49: #{tpu_custom_call.1} parent=0
    _
  %s6 = ssub.s32 1, %s4
  %s7 = scalar_select 0, %s6, %s4
  $region1: #{tpu_custom_call.1} parent=0
    #allocation2 [shape = 'u8[65536]{0}', space=vmem, size = 0x10000, scoped, tag = 'input window, operand 0']
    #allocation3 [shape = 's32[2]{0}', space=sflag, size = 0x8, scoped, tag = 'scoped memory for tpu_custom_call.1']
    #allocation4 [shape = 's32[2]{0}', space=sflag, size = 0x8, scoped, tag = 'scoped memory for tpu_custom_call.1']
    #allocation5 [shape = 'u8[65536]{0}', space=vmem, size = 0x10000, scoped, tag = 'output window, operand 0']
    %8 = vsyncpa [#allocation3], 0
    %s9 = scalar_lea.sflag [#allocation3], 1
    %10 = vsyncpa %s9, 0
    %11 = vsyncpa [#allocation4], 0
    %s12 = scalar_lea.sflag [#allocation4], 1
    %13 = vsyncpa %s12, 0
    loop: start=0, step=1, limit=4
    $region2: #{tpu_custom_call.1} parent=1 // loop_pre_header
      _
    $region3: #{tpu_custom_call.1} parent=1 // loop_header
      %s15 = sphi 0, %s19
      %p16 = scmp.ge.s32.totalorder %s15, 4
      %s25 = sphi 0, %s27
      %s28 = sphi 0, %s25
      %s29 = sphi 0, %s28
      %s45 = sphi 0, %s29
      %s49 = sphi 0, %s49
      %s51 = sphi 0, %s49
      %s52 = sphi 0, %s51
      %s66 = sphi 0, %s52
      %s70 = sphi 0, %s70
      %s72 = sphi 0, %s70
      %s73 = sphi 0, %s72
      %s87 = sphi 0, %s73
      %s93 = sphi 0, %s95
      %s96 = sphi 0, %s93
      %s97 = sphi 0, %s96
      %s113 = sphi 0, %s97
    $region4: #{tpu_custom_call.1} parent=1 // loop_header_branch
      %18 = sbr.rel (%p16) target = $region8
    $region5: #{tpu_custom_call.1} parent=1 // loop_body
      %s20 = ssub.s32 %s15, 1
      %s21 = ssub.s32 %s15, 2
      %s22 = sadd.s32 %s15, 1
      %s23 = ssub.s32 %s15, %s22
      %p24 = scmp.eq.s32.totalorder %s23, 0
      %s26 = sadd.s32 %s25, 1
      %s27 = scalar_select %p24, %s25, %s26
      %p30 = pneg %p24
      %p31 = scmp.eq.s32.totalorder %s15, 1
      %p32 = por %p30, %p31
      %p33 = scmp.ne.s32.totalorder %s25, %s28
      %p34 = scmp.eq.s32.totalorder %s15, 0
      %p35 = por %p33, %p34
      %p36 = scmp.ne.s32.totalorder %s25, %s28
      %p37 = scmp.eq.s32.totalorder %s20, 1
      %p38 = por %p36, %p37
      %p39 = scmp.ne.s32.totalorder %s28, %s29
      %p40 = scmp.eq.s32.totalorder %s20, 0
      %p41 = por %p39, %p40
      %p42 = scmp.ne.s32.totalorder %s28, %s29
      %p43 = scmp.eq.s32.totalorder %s21, 1
      %p44 = por %p42, %p43
      %p46 = scmp.ne.s32.totalorder %s29, %s45
      %p47 = scmp.eq.s32.totalorder %s21, 0
      %p48 = por %p46, %p47
      %s50 = sadd.s32 %s49, 1
      %p53 = scmp.eq.s32.totalorder %s15, 1
      %p54 = scmp.ne.s32.totalorder %s49, %s51
      %p55 = scmp.eq.s32.totalorder %s15, 0
      %p56 = por %p54, %p55
      %p57 = scmp.ne.s32.totalorder %s49, %s51
      %p58 = scmp.eq.s32.totalorder %s20, 1
      %p59 = por %p57, %p58
      %p60 = scmp.ne.s32.totalorder %s51, %s52
      %p61 = scmp.eq.s32.totalorder %s20, 0
      %p62 = por %p60, %p61
      %p63 = scmp.ne.s32.totalorder %s51, %s52
      %p64 = scmp.eq.s32.totalorder %s21, 1
      %p65 = por %p63, %p64
      %p67 = scmp.ne.s32.totalorder %s52, %s66
      %p68 = scmp.eq.s32.totalorder %s21, 0
      %p69 = por %p67, %p68
      %s71 = sadd.s32 %s70, 1
      %p74 = scmp.eq.s32.totalorder %s15, 1
      %p75 = scmp.ne.s32.totalorder %s70, %s72
      %p76 = scmp.eq.s32.totalorder %s15, 0
      %p77 = por %p75, %p76
      %p78 = scmp.ne.s32.totalorder %s70, %s72
      %p79 = scmp.eq.s32.totalorder %s20, 1
      %p80 = por %p78, %p79
      %p81 = scmp.ne.s32.totalorder %s72, %s73
      %p82 = scmp.eq.s32.totalorder %s20, 0
      %p83 = por %p81, %p82
      %p84 = scmp.ne.s32.totalorder %s72, %s73
      %p85 = scmp.eq.s32.totalorder %s21, 1
      %p86 = por %p84, %p85
      %p88 = scmp.ne.s32.totalorder %s73, %s87
      %p89 = scmp.eq.s32.totalorder %s21, 0
      %p90 = por %p88, %p89
      %s91 = ssub.s32 %s15, %s22
      %p92 = scmp.eq.s32.totalorder %s91, 0
      %s94 = sadd.s32 %s93, 1
      %s95 = scalar_select %p92, %s93, %s94
      %p98 = pneg %p92
      %p99 = scmp.eq.s32.totalorder %s15, 1
      %p100 = por %p98, %p99
      %p101 = scmp.ne.s32.totalorder %s93, %s96
      %p102 = scmp.eq.s32.totalorder %s15, 0
      %p103 = por %p101, %p102
      %p104 = scmp.ne.s32.totalorder %s93, %s96
      %p105 = scmp.eq.s32.totalorder %s20, 1
      %p106 = por %p104, %p105
      %p107 = scmp.ne.s32.totalorder %s96, %s97
      %p108 = scmp.eq.s32.totalorder %s20, 0
      %p109 = por %p107, %p108
      %p110 = scmp.ne.s32.totalorder %s96, %s97
      %p111 = scmp.eq.s32.totalorder %s21, 1
      %p112 = por %p110, %p111
      %p114 = scmp.ne.s32.totalorder %s97, %s113
      %p115 = scmp.eq.s32.totalorder %s21, 0
      %p116 = por %p114, %p115
      %p117 = scmp.le.s32.totalorder 1, %s15
      %p118 = scmp.lt.s32.totalorder %s15, 3
      %p119 = pnand %p117, %p118
      %p120 = pneg %p119
      // Predicated region
      $region9: #{tpu_custom_call.1} parent=5 // pred_check
        _
      $region10: #{tpu_custom_call.1} parent=5 // pred_check_branch
        %122 = sbr.rel (%p119) target = $region12
      $region11: #{tpu_custom_call.1} parent=5 // pred_region
        %s123 = ssub.s32 %s15, 1
        // Predicated region
        $region13: #{tpu_custom_call.1} parent=11 // pred_check
          %p124 = pneg %p62
        $region14: #{tpu_custom_call.1} parent=11 // pred_check_branch
          %126 = sbr.rel (%p124) target = $region16
        $region15: #{tpu_custom_call.1} parent=11 // pred_region
          _
        $region16: #{tpu_custom_call.1} parent=11 // pred_fallthru
          _
        // Predicated region
        $region17: #{tpu_custom_call.1} parent=11 // pred_check
          %p127 = pneg %p83
        $region18: #{tpu_custom_call.1} parent=11 // pred_check_branch
          %129 = sbr.rel (%p127) target = $region20
        $region19: #{tpu_custom_call.1} parent=11 // pred_region
          _
        $region20: #{tpu_custom_call.1} parent=11 // pred_fallthru
          _
      $region12: #{tpu_custom_call.1} parent=5 // pred_fallthru
        _
      %p130 = scmp.lt.s32.totalorder %s15, 2
      // Predicated region
      $region21: #{tpu_custom_call.1} parent=5 // pred_check
        %p131 = pneg %p130
      $region22: #{tpu_custom_call.1} parent=5 // pred_check_branch
        %133 = sbr.rel (%p131) target = $region24
      $region23: #{tpu_custom_call.1} parent=5 // pred_region
        // Predicated region
        $region25: #{tpu_custom_call.1} parent=23 // pred_check
          %p134 = pneg %p35
        $region26: #{tpu_custom_call.1} parent=23 // pred_check_branch
          %136 = sbr.rel (%p134) target = $region28
        $region27: #{tpu_custom_call.1} parent=23 // pred_region
          %s137 = sand.u32 %s25, 1
          %s138 = scalar_lea.sflag [#allocation3], %s137
          %s139 = sand.u32 %s25, 1
          %s140 = smul.addr %s139, 64
          %s141 = scalar_lea.vmem [#allocation2], %s140
          %s143 = ssub.s32 1024, 1024
          %144 = vsyncadd %s138, %s143
          %s145 = smul.addr %s15, 8
          %s146 = smul.addr %s145, 128
          %s147 = scalar_lea.hbm %s0, %s146
          %s148 = sshll.u32 %s141, 4
          %s149 = int_to_ptr.vmem [resolvable:$true] %s148
          %154 = dma.hbm_to_vmem [thread:$0]  %s147, 1024, %s149, %s138, 256, 256, 16
        $region28: #{tpu_custom_call.1} parent=23 // pred_fallthru
          _
      $region24: #{tpu_custom_call.1} parent=5 // pred_fallthru
        _
      %p155 = scmp.le.s32.totalorder 1, %s15
      %p156 = scmp.lt.s32.totalorder %s15, 3
      %p157 = pnand %p155, %p156
      %p158 = pneg %p157
      // Predicated region
      $region29: #{tpu_custom_call.1} parent=5 // pred_check
        _
      $region30: #{tpu_custom_call.1} parent=5 // pred_check_branch
        %160 = sbr.rel (%p157) target = $region32
      $region31: #{tpu_custom_call.1} parent=5 // pred_region
        %s161 = ssub.s32 %s15, 1
        %s162 = sand.u32 %s28, 1
        %s163 = scalar_lea.sflag [#allocation3], %s162
        %s164 = sand.u32 %s28, 1
        %s165 = smul.addr %s164, 64
        %s166 = scalar_lea.vmem [#allocation2], %s165
        // Predicated region
        $region33: #{tpu_custom_call.1} parent=31 // pred_check
          %p167 = pneg %p41
        $region34: #{tpu_custom_call.1} parent=31 // pred_check_branch
          %169 = sbr.rel (%p167) target = $region36
        $region35: #{tpu_custom_call.1} parent=31 // pred_region
          %170 = dma.done %s163, 1024
        $region36: #{tpu_custom_call.1} parent=31 // pred_fallthru
          _
        %s171 = sand.u32 %s28, 1
        %s172 = scalar_lea.sflag [#allocation3], %s171
        %s173 = sand.u32 %s28, 1
        %s174 = smul.addr %s173, 64
        %s175 = scalar_lea.vmem [#allocation2], %s174
        %p176 = pneg %p41
        %p177 = pneg %p38
        %p178 = pneg %p62
        %p179 = pneg %p59
        %p180 = pneg %p83
        %p181 = pneg %p80
        %p182 = pneg %p109
        %p183 = pneg %p106
        %s184 = sand.u32 %s96, 1
        %s185 = scalar_lea.sflag [#allocation4], %s184
        %s186 = sand.u32 %s96, 1
        %s187 = smul.addr %s186, 64
        %s188 = scalar_lea.vmem [#allocation5], %s187
        %v189 = vld [vmem:[%s166] sm:$0xff]
        %v190 = vld [vmem:[%s166 + $0x8] sm:$0xff]
        %v191 = vld [vmem:[%s166 + $0x10] sm:$0xff]
        %v192 = vld [vmem:[%s166 + $0x18] sm:$0xff]
        %v193 = vld [vmem:[%s166 + $0x20] sm:$0xff]
        %v194 = vld [vmem:[%s166 + $0x28] sm:$0xff]
        %v195 = vld [vmem:[%s166 + $0x30] sm:$0xff]
        %v196 = vld [vmem:[%s166 + $0x38] sm:$0xff]
        %v197 = vadd.f32 %v189, %v190
        %198 = vadd.xlane.f32.xlu0 %v197
        %v199 = vpop.xlane.xlu0 %198
        %v200 = vadd.f32 %v191, %v192
        %201 = vadd.xlane.f32.xlu0 %v200
        %v202 = vpop.xlane.xlu0 %201
        %v203 = vadd.f32 %v193, %v194
        %204 = vadd.xlane.f32.xlu0 %v203
        %v205 = vpop.xlane.xlu0 %204
        %v206 = vadd.f32 %v195, %v196
        %207 = vadd.xlane.f32.xlu0 %v206
        %v208 = vpop.xlane.xlu0 %207
        %v209 = vmul.f32 %v199, 0.00390625
        %v210 = vmul.f32 %v202, 0.00390625
        %v211 = vmul.f32 %v205, 0.00390625
        %v212 = vmul.f32 %v208, 0.00390625
        %v213 = vmax.f32 %v189, %v190
        %214 = vmax.xlane.f32.xlu0 %v213
        %v215 = vpop.xlane.xlu0 %214
        %v216 = vmax.f32 %v191, %v192
        %217 = vmax.xlane.f32.xlu0 %v216
        %v218 = vpop.xlane.xlu0 %217
        %v219 = vmax.f32 %v193, %v194
        %220 = vmax.xlane.f32.xlu0 %v219
        %v221 = vpop.xlane.xlu0 %220
        %v222 = vmax.f32 %v195, %v196
        %223 = vmax.xlane.f32.xlu0 %v222
        %v224 = vpop.xlane.xlu0 %223
        %v225 = vld [vmem:[%s1] sm:$0x3]
        %v226 = vld [vmem:[%s2] sm:$0xff]
        %v227 = vld [vmem:[%s2 + $0x8] sm:$0xff]
        %v228 = vld [vmem:[%s2 + $0x10] sm:$0xff]
        %v229 = vld [vmem:[%s2 + $0x18] sm:$0xff]
        %v230 = vlaneseq
        %v231 = vand.u32 %v230, 127
        %vm232 = vcmp.eq.s32.totalorder %v231, 0
        %v233 = vsel %vm232, %v209, %v215
        %v234 = vsel %vm232, %v210, %v218
        %v235 = vsel %vm232, %v211, %v221
        %v236 = vsel %vm232, %v212, %v224
        %vm237 = vcmask 261120
        %v239 = vsel %vm237, %v225, 0
        %241 = vmatprep.subr.mxu0 0.0
        %242 = vmatpush1.msra.mxu0 %v233
        %243 = vmatprep.subr.mxu0 0.0
        %244 = vmatpush1.msra.mxu0 %v234
        %245 = vmatprep.subr.mxu0 0.0
        %246 = vmatpush1.msra.mxu0 %v235
        %247 = vmatprep.subr.mxu0 0.0
        %248 = vmatpush1.msra.mxu0 %v236
        %249 = vmatprep.subr.mxu0 0.0
        %250 = vmatpush1.msra.mxu0 0.0
        %251 = vmatprep.subr.mxu0 0.0
        %252 = vmatpush1.msra.mxu0 0.0
        %253 = vmatprep.subr.mxu0 0.0
        %254 = vmatpush1.msra.mxu0 0.0
        %255 = vmatprep.subr.mxu0 0.0
        %256 = vmatpush1.msra.mxu0 0.0
        %257 = vmatprep.subr.mxu0 0.0
        %258 = vmatpush1.msra.mxu0 0.0
        %259 = vmatprep.subr.mxu0 0.0
        %260 = vmatpush1.msra.mxu0 0.0
        %261 = vmatprep.subr.mxu0 0.0
        %262 = vmatpush1.msra.mxu0 0.0
        %263 = vmatprep.subr.mxu0 0.0
        %264 = vmatpush1.msra.mxu0 0.0
        %265 = vmatprep.subr.mxu0 0.0
        %266 = vmatpush1.msra.mxu0 0.0
        %267 = vmatprep.subr.mxu0 0.0
        %268 = vmatpush1.msra.mxu0 0.0
        %269 = vmatprep.subr.mxu0 0.0
        %270 = vmatpush1.msra.mxu0 0.0
        %271 = vmatprep.subr.mxu0 0.0
        %272 = vmatpush1.msra.mxu0 0.0
        %273 = vmatprep.subr.mxu0 0.0
        %274 = vmatpush1.msra.mxu0 0.0
        %275 = vmatprep.subr.mxu0 0.0
        %276 = vmatpush1.msra.mxu0 0.0
        %277 = vmatprep.subr.mxu0 0.0
        %278 = vmatpush1.msra.mxu0 0.0
        %279 = vmatprep.subr.mxu0 0.0
        %280 = vmatpush1.msra.mxu0 0.0
        %281 = vmatprep.subr.mxu0 0.0
        %282 = vmatpush1.msra.mxu0 0.0
        %283 = vmatprep.subr.mxu0 0.0
        %284 = vmatpush1.msra.mxu0 0.0
        %285 = vmatprep.subr.mxu0 0.0
        %286 = vmatpush1.msra.mxu0 0.0
        %287 = vmatprep.subr.mxu0 0.0
        %288 = vmatpush1.msra.mxu0 0.0
        %289 = vmatprep.subr.mxu0 0.0
        %290 = vmatpush1.msra.mxu0 0.0
        %291 = vmatprep.subr.mxu0 0.0
        %292 = vmatpush1.msra.mxu0 0.0
        %293 = vmatprep.subr.mxu0 0.0
        %294 = vmatpush1.msra.mxu0 0.0
        %295 = vmatprep.subr.mxu0 0.0
        %296 = vmatpush1.msra.mxu0 0.0
        %297 = vmatprep.subr.mxu0 0.0
        %298 = vmatpush1.msra.mxu0 0.0
        %299 = vmatprep.subr.mxu0 0.0
        %300 = vmatpush1.msra.mxu0 0.0
        %301 = vmatprep.subr.mxu0 0.0
        %302 = vmatpush1.msra.mxu0 0.0
        %303 = vmatprep.subr.mxu0 0.0
        %304 = vmatpush1.msra.mxu0 0.0
        %305 = vmatprep.mubr.f32.mxu0 0.0
        %306 = vmatmul.mubr.f32.gmra.mrb[0].mxu0 %v239
        %v307 = vpop.f32.mrb[0].mxu0
        %v308 = vadd.f32 0.0, %v307
        %v309 = vpop.f32.mrb[0].mxu0
        %310 = vdwg.mxu0
        %v311 = vmax.f32 %v308, 0.0
        %vm312 = vcmask 15360
        %v314 = vsel %vm312, %v226, 0
        %v317 = vsel %vm312, %v227, 0
        %v320 = vsel %vm312, %v228, 0
        %v323 = vsel %vm312, %v229, 0
        %vm325 = vcmask 1041408
        %v327 = vsel %vm325, %v311, 0
        %329 = vmatprep.subr.mxu0 0.0
        %330 = vmatpush1.msra.mxu0 %v327
        %331 = vmatprep.subr.mxu0 0.0
        %332 = vmatpush1.msra.mxu0 0.0
        %333 = vmatprep.subr.mxu0 0.0
        %334 = vmatpush1.msra.mxu0 0.0
        %335 = vmatprep.subr.mxu0 0.0
        %336 = vmatpush1.msra.mxu0 0.0
        %337 = vmatprep.subr.mxu0 0.0
        %338 = vmatpush1.msra.mxu0 0.0
        %339 = vmatprep.subr.mxu0 0.0
        %340 = vmatpush1.msra.mxu0 0.0
        %341 = vmatprep.subr.mxu0 0.0
        %342 = vmatpush1.msra.mxu0 0.0
        %343 = vmatprep.subr.mxu0 0.0
        %344 = vmatpush1.msra.mxu0 0.0
        %345 = vmatprep.subr.mxu0 0.0
        %346 = vmatpush1.msra.mxu0 0.0
        %347 = vmatprep.subr.mxu0 0.0
        %348 = vmatpush1.msra.mxu0 0.0
        %349 = vmatprep.subr.mxu0 0.0
        %350 = vmatpush1.msra.mxu0 0.0
        %351 = vmatprep.subr.mxu0 0.0
        %352 = vmatpush1.msra.mxu0 0.0
        %353 = vmatprep.subr.mxu0 0.0
        %354 = vmatpush1.msra.mxu0 0.0
        %355 = vmatprep.subr.mxu0 0.0
        %356 = vmatpush1.msra.mxu0 0.0
        %357 = vmatprep.subr.mxu0 0.0
        %358 = vmatpush1.msra.mxu0 0.0
        %359 = vmatprep.subr.mxu0 0.0
        %360 = vmatpush1.msra.mxu0 0.0
        %361 = vmatprep.subr.mxu0 0.0
        %362 = vmatpush1.msra.mxu0 0.0
        %363 = vmatprep.subr.mxu0 0.0
        %364 = vmatpush1.msra.mxu0 0.0
        %365 = vmatprep.subr.mxu0 0.0
        %366 = vmatpush1.msra.mxu0 0.0
        %367 = vmatprep.subr.mxu0 0.0
        %368 = vmatpush1.msra.mxu0 0.0
        %369 = vmatprep.subr.mxu0 0.0
        %370 = vmatpush1.msra.mxu0 0.0
        %371 = vmatprep.subr.mxu0 0.0
        %372 = vmatpush1.msra.mxu0 0.0
        %373 = vmatprep.subr.mxu0 0.0
        %374 = vmatpush1.msra.mxu0 0.0
        %375 = vmatprep.subr.mxu0 0.0
        %376 = vmatpush1.msra.mxu0 0.0
        %377 = vmatprep.subr.mxu0 0.0
        %378 = vmatpush1.msra.mxu0 0.0
        %379 = vmatprep.subr.mxu0 0.0
        %380 = vmatpush1.msra.mxu0 0.0
        %381 = vmatprep.subr.mxu0 0.0
        %382 = vmatpush1.msra.mxu0 0.0
        %383 = vmatprep.subr.mxu0 0.0
        %384 = vmatpush1.msra.mxu0 0.0
        %385 = vmatprep.subr.mxu0 0.0
        %386 = vmatpush1.msra.mxu0 0.0
        %387 = vmatprep.subr.mxu0 0.0
        %388 = vmatpush1.msra.mxu0 0.0
        %389 = vmatprep.subr.mxu0 0.0
        %390 = vmatpush1.msra.mxu0 0.0
        %391 = vmatprep.subr.mxu0 0.0
        %392 = vmatpush1.msra.mxu0 0.0
        %393 = vmatprep.mubr.f32.mxu0 0.0
        %394 = vmatmul.mubr.f32.gmra.mrb[0].mxu0 %v314
        %v395 = vpop.f32.mrb[0].mxu0
        %v396 = vadd.f32 0.0, %v395
        %v397 = vpop.f32.mrb[0].mxu0
        %398 = vmatprep.mubr.f32.mxu0 0.0
        %399 = vmatmul.mubr.f32.gmra.mrb[0].mxu0 %v317
        %v400 = vpop.f32.mrb[0].mxu0
        %v401 = vadd.f32 0.0, %v400
        %v402 = vpop.f32.mrb[0].mxu0
        %403 = vmatprep.mubr.f32.mxu0 0.0
        %404 = vmatmul.mubr.f32.gmra.mrb[0].mxu0 %v320
        %v405 = vpop.f32.mrb[0].mxu0
        %v406 = vadd.f32 0.0, %v405
        %v407 = vpop.f32.mrb[0].mxu0
        %408 = vmatprep.mubr.f32.mxu0 0.0
        %409 = vmatmul.mubr.f32.gmra.mrb[0].mxu0 %v323
        %v410 = vpop.f32.mrb[0].mxu0
        %v411 = vadd.f32 0.0, %v410
        %v412 = vpop.f32.mrb[0].mxu0
        %413 = vdwg.mxu0
        %v414 = vsel %vm312, %v396, 0.0
        %415 = vadd.xlane.f32.xlu0 %v414
        %v416 = vpop.xlane.xlu0 %415
        %v417 = vsel %vm312, %v401, 0.0
        %418 = vadd.xlane.f32.xlu0 %v417
        %v419 = vpop.xlane.xlu0 %418
        %v420 = vsel %vm312, %v406, 0.0
        %421 = vadd.xlane.f32.xlu0 %v420
        %v422 = vpop.xlane.xlu0 %421
        %v423 = vsel %vm312, %v411, 0.0
        %424 = vadd.xlane.f32.xlu0 %v423
        %v425 = vpop.xlane.xlu0 %424
        %v426 = vxor.u32 %v416, 2147483648
        %v427 = vxor.u32 %v419, 2147483648
        %v428 = vxor.u32 %v422, 2147483648
        %v429 = vxor.u32 %v425, 2147483648
        %v430 = vmul.f32 %v426, 1.442695
        %v431 = vpow.pop %v430
        %v432 = vmul.f32 %v427, 1.442695
        %v433 = vpow.pop %v432
        %v434 = vmul.f32 %v428, 1.442695
        %v435 = vpow.pop %v434
        %v436 = vmul.f32 %v429, 1.442695
        %v437 = vpow.pop %v436
        %v438 = vadd.f32 %v431, 1.0
        %v439 = vadd.f32 %v433, 1.0
        %v440 = vadd.f32 %v435, 1.0
        %v441 = vadd.f32 %v437, 1.0
        %v442 = vrcp.pop %v438
        %v443 = vmul.f32 1.0, %v442
        %v444 = vrcp.pop %v439
        %v445 = vmul.f32 1.0, %v444
        %v446 = vrcp.pop %v440
        %v447 = vmul.f32 1.0, %v446
        %v448 = vrcp.pop %v441
        %v449 = vmul.f32 1.0, %v448
        %v450 = vmul.f32 %v189, %v443
        %v451 = vmul.f32 %v190, %v443
        %v452 = vmul.f32 %v191, %v445
        %v453 = vmul.f32 %v192, %v445
        %v454 = vmul.f32 %v193, %v447
        %v455 = vmul.f32 %v194, %v447
        %v456 = vmul.f32 %v195, %v449
        %v457 = vmul.f32 %v196, %v449
        %458 = vst [vmem:[%s188] sm:$0xff] %v450
        %459 = vst [vmem:[%s188 + $0x8] sm:$0xff] %v451
        %460 = vst [vmem:[%s188 + $0x10] sm:$0xff] %v452
        %461 = vst [vmem:[%s188 + $0x18] sm:$0xff] %v453
        %462 = vst [vmem:[%s188 + $0x20] sm:$0xff] %v454
        %463 = vst [vmem:[%s188 + $0x28] sm:$0xff] %v455
        %464 = vst [vmem:[%s188 + $0x30] sm:$0xff] %v456
        %465 = vst [vmem:[%s188 + $0x38] sm:$0xff] %v457
        %s466 = sand.u32 %s96, 1
        %s467 = scalar_lea.sflag [#allocation4], %s466
        %s468 = sand.u32 %s96, 1
        %s469 = smul.addr %s468, 64
        %s470 = scalar_lea.vmem [#allocation5], %s469
        // Predicated region
        $region37: #{tpu_custom_call.1} parent=31 // pred_check
          %p471 = pneg %p106
        $region38: #{tpu_custom_call.1} parent=31 // pred_check_branch
          %473 = sbr.rel (%p471) target = $region40
        $region39: #{tpu_custom_call.1} parent=31 // pred_region
          %s475 = ssub.s32 1024, 1024
          %476 = vsyncadd %s467, %s475
          %s477 = smul.addr %s20, 8
          %s478 = smul.addr %s477, 128
          %s479 = scalar_lea.hbm %s3, %s478
          %s480 = sshll.u32 %s470, 4
          %s481 = int_to_ptr.vmem [resolvable:$true] %s480
          %486 = dma.vmem_to_hbm [thread:$0]  %s481, 1024, %s479, %s467, 256, 256, 16
        $region40: #{tpu_custom_call.1} parent=31 // pred_fallthru
          _
      $region32: #{tpu_custom_call.1} parent=5 // pred_fallthru
        _
      %p487 = scmp.le.s32.totalorder 2, %s15
      // Predicated region
      $region41: #{tpu_custom_call.1} parent=5 // pred_check
        %p488 = pneg %p487
      $region42: #{tpu_custom_call.1} parent=5 // pred_check_branch
        %490 = sbr.rel (%p488) target = $region44
      $region43: #{tpu_custom_call.1} parent=5 // pred_region
        %s491 = ssub.s32 %s15, 2
        // Predicated region
        $region45: #{tpu_custom_call.1} parent=43 // pred_check
          %p492 = pneg %p112
        $region46: #{tpu_custom_call.1} parent=43 // pred_check_branch
          %494 = sbr.rel (%p492) target = $region48
        $region47: #{tpu_custom_call.1} parent=43 // pred_region
          %s495 = sand.u32 %s97, 1
          %s496 = scalar_lea.sflag [#allocation4], %s495
          %s497 = sand.u32 %s97, 1
          %s498 = smul.addr %s497, 64
          %s499 = scalar_lea.vmem [#allocation5], %s498
          %500 = dma.done %s496, 1024
        $region48: #{tpu_custom_call.1} parent=43 // pred_fallthru
          _
      $region44: #{tpu_custom_call.1} parent=5 // pred_fallthru
        _
    $region6: #{tpu_custom_call.1} parent=1 // loop_footer
      %s19 = sadd.s32 1, %s15
    $region7: #{tpu_custom_call.1} parent=1 // loop_footer_branch
      %14 = sbr.rel target = $region3
    $region8: #{tpu_custom_call.1} parent=1 // loop_exit
      _
    %501 = vsyncpa [#allocation3], 1
    %s502 = scalar_lea.sflag [#allocation3], 1
    %503 = vsyncpa %s502, 1
    %504 = vsyncpa [#allocation4], 1
    %s505 = scalar_lea.sflag [#allocation4], 1
    %506 = vsyncpa %s505, 1

</llo_original>
